<compile_context>
chip_gen: v6e
topology: v6e:2x2x1
jax: 0.10.0
libtpu: 0.0.40
codegen_flags: <defaults>
</compile_context>

<pallas_src>
import functools

import jax
import jax.numpy as jnp
from jax.experimental import pallas as pl
from jax.experimental.pallas import tpu as pltpu


def _context_mask_r_kernel(index_ref, shift_ref, out_ref, *, scale):
    # index_ref/out_ref: (TB, TL); shift_ref: (TB, 1) holds c + w/2.
    idx = index_ref[...].astype(jnp.float32)             # (TB, TL)
    shift = shift_ref[...].astype(jnp.float32)           # (TB, 1) -> broadcast over lanes
    z = scale * (idx - shift)                             # (TB, TL)
    out_ref[...] = jax.nn.sigmoid(z).astype(out_ref.dtype)


def _context_mask_r_ramp_kernel(shift_ref, out_ref, *, scale):
    # Fast path for index[b, l] == l: synthesize positions in-kernel, no HBM
    # read for `index` (kernel is HBM-bandwidth bound, this halves traffic).
    tb, tl = out_ref.shape
    il = pl.program_id(1)
    pos = jax.lax.broadcasted_iota(jnp.int32, (tb, tl), 1) + il * tl
    shift = shift_ref[...].astype(jnp.float32)            # (TB, 1)
    z = scale * (pos.astype(jnp.float32) - shift)
    out_ref[...] = jax.nn.sigmoid(z).astype(out_ref.dtype)


def _tile_sizes(B, L, block_b, block_l):
    # Sublane axis (B) multiple of 8, lane axis (L) multiple of 128 whenever
    # the array is big enough; otherwise use the full extent (legal block).
    tb = min(block_b, (B // 8) * 8) if B >= 8 else B
    tl = min(block_l, (L // 128) * 128) if L >= 128 else L
    # v7x megacore: make sure the grid has >= 2 steps when the problem can be
    # split, so dimension_semantics=("parallel","parallel") can shard work
    # across both TensorCores. Neutral on single-TC v5e/v6e.
    if pl.cdiv(B, tb) * pl.cdiv(L, tl) == 1:
        if L >= 256:
            tl = ((pl.cdiv(L, 2) + 127) // 128) * 128
        elif B >= 16:
            tb = ((pl.cdiv(B, 2) + 7) // 8) * 8
    return tb, tl


def _out_dtype(*dtypes):
    dt = jnp.result_type(*dtypes)
    if not jnp.issubdtype(dt, jnp.floating):
        dt = jnp.float32  # sigmoid result is in (0,1); never emit an int dtype
    return dt


def _fold_shift(c, w, B):
    # shift = c + w/2, computed once in f32 in the wrapper (tiny (B,1) array).
    return (c.reshape(B, 1).astype(jnp.float32)
            + 0.5 * w.reshape(B, 1).astype(jnp.float32))


def context_mask_r(index, c, w, *, scale, block_b=256, block_l=4096):
    """index: (B, L, 1), c: (B, 1, 1), w: (B, 1, 1) -> (B, L, 1)."""
    B, L, _ = index.shape
    out_dtype = _out_dtype(index.dtype, c.dtype, w.dtype)

    index2d = index.reshape(B, L)
    shift2d = _fold_shift(c, w, B)

    tb, tl = _tile_sizes(B, L, block_b, block_l)
    grid = (pl.cdiv(B, tb), pl.cdiv(L, tl))

    kernel = functools.partial(_context_mask_r_kernel, scale=float(scale))

    cost = pl.CostEstimate(
        flops=5 * B * L,                              # sub, mul, add, div (+exp below)
        transcendentals=B * L,                        # one exp per element
        bytes_accessed=(B * L * index2d.dtype.itemsize
                        + B * L * jnp.dtype(out_dtype).itemsize
                        + B * 4),
    )

    out2d = pl.pallas_call(
        kernel,
        out_shape=jax.ShapeDtypeStruct((B, L), out_dtype),
        grid=grid,
        in_specs=[
            pl.BlockSpec((tb, tl), lambda ib, il: (ib, il)),
            pl.BlockSpec((tb, 1), lambda ib, il: (ib, 0)),   # shift: constant in L
        ],
        out_specs=pl.BlockSpec((tb, tl), lambda ib, il: (ib, il)),
        compiler_params=pltpu.CompilerParams(
            dimension_semantics=("parallel", "parallel"),
            vmem_limit_bytes=40 * 1024 * 1024,
        ),
        cost_estimate=cost,
    )(index2d, shift2d)

    return out2d.reshape(B, L, 1)


def context_mask_r_ramp(c, w, length, *, scale, block_b=256, block_l=8192):
    """Fast path when index[b, l] == l for all b. c/w: (B, 1, 1) -> (B, L, 1)."""
    B = c.shape[0]
    L = int(length)
    out_dtype = _out_dtype(c.dtype, w.dtype)

    shift2d = _fold_shift(c, w, B)

    tb, tl = _tile_sizes(B, L, block_b, block_l)
    grid = (pl.cdiv(B, tb), pl.cdiv(L, tl))

    kernel = functools.partial(_context_mask_r_ramp_kernel, scale=float(scale))

    cost = pl.CostEstimate(
        flops=5 * B * L,
        transcendentals=B * L,
        bytes_accessed=B * L * jnp.dtype(out_dtype).itemsize + B * 4,
    )

    out2d = pl.pallas_call(
        kernel,
        out_shape=jax.ShapeDtypeStruct((B, L), out_dtype),
        grid=grid,
        in_specs=[pl.BlockSpec((tb, 1), lambda ib, il: (ib, 0))],
        out_specs=pl.BlockSpec((tb, tl), lambda ib, il: (ib, il)),
        compiler_params=pltpu.CompilerParams(
            dimension_semantics=("parallel", "parallel"),
            vmem_limit_bytes=40 * 1024 * 1024,
        ),
        cost_estimate=cost,
    )(shift2d)

    return out2d.reshape(B, L, 1)


def context_mask_r_ref(index, c, w, *, scale):
    """Pure-JAX reference matching PyTorch ContextMaskR.forward."""
    return jax.nn.sigmoid(scale * (index.astype(jnp.float32) - c - w / 2))


if __name__ == "__main__":
    key = jax.random.PRNGKey(0)
    scale = 10.0  # module __init__ parameter

    k1, k2, k3, k4, k5, k6, k7, k8 = jax.random.split(key, 8)

    # Case 1: small module-consistent shape (batch=2, length=8), float32.
    B, L = 2, 8
    index = jax.random.uniform(k1, (B, L, 1), dtype=jnp.float32)
    c = jax.random.uniform(k2, (B, 1, 1), dtype=jnp.float32)
    w = 0.5 * jax.random.uniform(k3, (B, 1, 1), dtype=jnp.float32)

    out = context_mask_r(index, c, w, scale=scale)
    jax.block_until_ready(out)
    ref = context_mask_r_ref(index, c, w, scale=scale)
    assert out.shape == (B, L, 1), out.shape
    assert out.dtype == jnp.float32, out.dtype
    assert jnp.allclose(out, ref, atol=1e-5, rtol=1e-5), "mismatch (small f32)"

    # Case 2: larger shape exercising the tiled (8, 128) path and the
    # grid-never-collapses-to-(1,1) split.
    B2, L2 = 8, 256
    index2 = jax.random.uniform(k4, (B2, L2, 1), dtype=jnp.float32)
    c2 = jax.random.uniform(k5, (B2, 1, 1), dtype=jnp.float32)
    w2 = 0.5 * jax.random.uniform(k6, (B2, 1, 1), dtype=jnp.float32)

    out2 = context_mask_r(index2, c2, w2, scale=scale)
    jax.block_until_ready(out2)
    ref2 = context_mask_r_ref(index2, c2, w2, scale=scale)
    assert out2.shape == (B2, L2, 1), out2.shape
    assert jnp.allclose(out2, ref2, atol=1e-5, rtol=1e-5), "mismatch (tiled)"

    # Case 3: integer positional `index` -> output must be float (dtype fix).
    index_i = jnp.broadcast_to(jnp.arange(L, dtype=jnp.int32)[None, :, None], (B, L, 1))
    out3 = context_mask_r(index_i, c, w, scale=scale)
    jax.block_until_ready(out3)
    ref3 = context_mask_r_ref(index_i, c, w, scale=scale)
    assert jnp.issubdtype(out3.dtype, jnp.floating), out3.dtype
    assert jnp.allclose(out3, ref3, atol=1e-5, rtol=1e-5), "mismatch (int index)"

    # Case 4: in-kernel ramp fast path (no `index` streamed from HBM).
    out4 = context_mask_r_ramp(c2, w2, L2, scale=scale)
    jax.block_until_ready(out4)
    index_ramp = jnp.broadcast_to(
        jnp.arange(L2, dtype=jnp.float32)[None, :, None], (B2, L2, 1))
    ref4 = context_mask_r_ref(index_ramp, c2, w2, scale=scale)
    assert out4.shape == (B2, L2, 1), out4.shape
    assert jnp.allclose(out4, ref4, atol=1e-5, rtol=1e-5), "mismatch (ramp path)"

    # Case 5: bf16 I/O passthrough (compute in f32 inside the kernel).
    out5 = context_mask_r(index2.astype(jnp.bfloat16), c2.astype(jnp.bfloat16),
                          w2.astype(jnp.bfloat16), scale=scale)
    jax.block_until_ready(out5)
    ref5 = context_mask_r_ref(index2.astype(jnp.bfloat16), c2, w2, scale=scale)
    assert out5.dtype == jnp.bfloat16, out5.dtype
    assert jnp.allclose(out5.astype(jnp.float32), ref5, atol=1e-2), "mismatch (bf16)"

    print("KERNEL_OK")
</pallas_src>

<mosaic_0001>
module attributes {stable_mosaic.version = 11 : i64} {
  func.func @_context_mask_r_kernel(%arg0: i32, %arg1: i32, %arg2: memref<2x8xf32, #tpu.memory_space<vmem>>, %arg3: memref<2x1xf32, #tpu.memory_space<vmem>>, %arg4: memref<2x8xf32, #tpu.memory_space<vmem>>) attributes {dimension_semantics = [#tpu.dimension_semantics<parallel>, #tpu.dimension_semantics<parallel>], iteration_bounds = array<i64: 1, 1>, scalar_prefetch = 0 : i64, scratch_operands = 0 : i64, tpu.core_type = #tpu.core_type<tc>, window_params = [{transform_indices = @transform_0, window_bounds = array<i64: 2, 8>}, {transform_indices = @transform_1, window_bounds = array<i64: 2, 1>}, {transform_indices = @transform_2, window_bounds = array<i64: 2, 8>}]} {
    %c0 = arith.constant 0 : index
    %c0_0 = arith.constant 0 : index
    %0 = vector.load %arg2[%c0, %c0_0] : memref<2x8xf32, #tpu.memory_space<vmem>>, vector<2x8xf32>
    %c0_1 = arith.constant 0 : index
    %c0_2 = arith.constant 0 : index
    %1 = vector.load %arg3[%c0_1, %c0_2] : memref<2x1xf32, #tpu.memory_space<vmem>>, vector<2x1xf32>
    %2 = vector.broadcast %1 : vector<2x1xf32> to vector<2x8xf32>
    %3 = arith.subf %0, %2 : vector<2x8xf32>
    %cst = arith.constant 1.000000e+01 : f32
    %4 = vector.broadcast %cst : f32 to vector<2x8xf32>
    %5 = arith.mulf %4, %3 : vector<2x8xf32>
    %6 = arith.negf %5 : vector<2x8xf32>
    %7 = math.exp %6 : vector<2x8xf32>
    %cst_3 = arith.constant 1.000000e+00 : f32
    %8 = vector.broadcast %cst_3 : f32 to vector<2x8xf32>
    %9 = arith.addf %8, %7 : vector<2x8xf32>
    %10 = arith.divf %8, %9 : vector<2x8xf32>
    %c0_4 = arith.constant 0 : index
    %c0_5 = arith.constant 0 : index
    %11 = vector.load %arg4[%c0_4, %c0_5] : memref<2x8xf32, #tpu.memory_space<vmem>>, vector<2x8xf32>
    tpu.vector_store %arg4[%c0_4, %c0_5], %10 {strides = array<i32>} : memref<2x8xf32, #tpu.memory_space<vmem>>, vector<2x8xf32>,
    return
  }
  func.func @transform_0(%arg0: i32, %arg1: i32) -> (i32, i32) {
    %c0_i32 = arith.constant 0 : i32
    return %arg0, %arg1 : i32, i32
  }
  func.func @transform_1(%arg0: i32, %arg1: i32) -> (i32, i32) {
    %c0_i32 = arith.constant 0 : i32
    %c0_i32_0 = arith.constant 0 : i32
    return %arg0, %c0_i32 : i32, i32
  }
  func.func @transform_2(%arg0: i32, %arg1: i32) -> (i32, i32) {
    %c0_i32 = arith.constant 0 : i32
    return %arg0, %arg1 : i32, i32
  }
}

</mosaic_0001>

<llo_original>
// kernel: tpu_custom_call.1
$region0: #{tpu_custom_call.1}
  #allocation0 [shape = 'u32[]', space=smem, size = 0x4, offset = 0x4, fixed_abs, tag = 'smem constant byte address 0x4 - core index']
  #allocation1 [shape = 'u32[144,128]{1,0:T(1,128)}', space=vmem, size = 0x12000, scoped, tag = 'internal scratch']
  %s0 = inlined_call_operand.vmem [shape: f32[2,8], index: 0, kind: input, shape index: {}]
  %s1 = inlined_call_operand.vmem [shape: f32[2,1], index: 1, kind: input, shape index: {}]
  %s2 = inlined_call_operand.hbm [shape: f32[2,8], index: 2, kind: output, shape index: {}]
  %s3 = sld [smem:[#allocation0]]
  $region18: #{tpu_custom_call.1} parent=0
    _
  %s5 = ssub.s32 1, %s3
  %s6 = scalar_select 0, %s5, %s3
  $region1: #{tpu_custom_call.1} parent=0
    #allocation2 [shape = 'u8[1024]{0}', space=vmem, size = 0x400, scoped, tag = 'output window, operand 0, single buffered']
    #allocation3 [shape = 's32[1]{0}', space=sflag, size = 0x4, scoped, tag = 'scoped memory for tpu_custom_call.1']
    %7 = vsyncpa [#allocation3], 0
    // Predicated region
    $region2: #{tpu_custom_call.1} parent=1 // pred_check
      _
    $region3: #{tpu_custom_call.1} parent=1 // pred_check_branch
      %9 = sbr.rel (0) target = $region5
    $region4: #{tpu_custom_call.1} parent=1 // pred_region
      _
    $region5: #{tpu_custom_call.1} parent=1 // pred_fallthru
      _
    // Predicated region
    $region6: #{tpu_custom_call.1} parent=1 // pred_check
      _
    $region7: #{tpu_custom_call.1} parent=1 // pred_check_branch
      %11 = sbr.rel (0) target = $region9
    $region8: #{tpu_custom_call.1} parent=1 // pred_region
      _
    $region9: #{tpu_custom_call.1} parent=1 // pred_fallthru
      _
    %v12 = vld [vmem:[%s0] sm:$0x3]
    %v13 = vld [vmem:[%s1] sm:$0x3]
    %15 = vset.pattern.permute.xlu0 0
    %16 = vperm.xlu0 %15, %v13
    %v17 = vpop.permute.xlu0 %16
    %v19 = vsub.f32 %v12, %v17
    %v20 = vmul.f32 %v19, 10.0
    %v21 = vxor.u32 %v20, 2147483648
    %v22 = vmul.f32 %v21, 1.442695
    %v23 = vpow.pop %v22
    %v24 = vadd.f32 %v23, 1.0
    %v25 = vrcp.pop %v24
    %v26 = vmul.f32 1.0, %v25
    %vm27 = vcmask 58368
    %28 = vst.msk [vmem:[#allocation2] sm:$0x3] %vm27, %v26
    // Predicated region
    $region10: #{tpu_custom_call.1} parent=1 // pred_check
      _
    $region11: #{tpu_custom_call.1} parent=1 // pred_check_branch
      %30 = sbr.rel (0) target = $region13
    $region12: #{tpu_custom_call.1} parent=1 // pred_region
      %s32 = ssub.s32 32, 32
      %33 = vsyncadd [#allocation3], %s32
      %s35 = sshll.u32 [#allocation2], 4
      %s36 = int_to_ptr.vmem [resolvable:$true] %s35
      %38 = dma.vmem_to_hbm [thread:$0]  %s36, 32, %s2, [#allocation3]
    $region13: #{tpu_custom_call.1} parent=1 // pred_fallthru
      _
    // Predicated region
    $region14: #{tpu_custom_call.1} parent=1 // pred_check
      _
    $region15: #{tpu_custom_call.1} parent=1 // pred_check_branch
      %40 = sbr.rel (0) target = $region17
    $region16: #{tpu_custom_call.1} parent=1 // pred_region
      %41 = dma.done [#allocation3], 32
    $region17: #{tpu_custom_call.1} parent=1 // pred_fallthru
      _
    %42 = vsyncpa [#allocation3], 1

</llo_original>
